<compile_context>
chip_gen: v5e
topology: v5e:2x2
jax: 0.10.0
libtpu: 0.0.40
codegen_flags: <defaults>
</compile_context>

<pallas_src>
import functools

import jax
import jax.numpy as jnp
from jax.experimental import pallas as pl
from jax.experimental.pallas import tpu as pltpu


_MAX_TILE_N = 1024   # rows per grid step (kept a multiple of 16)
_MAX_TILE_O = 512    # output features per grid step (multiple of 128)


def _round_up(x, m):
    return ((x + m - 1) // m) * m


def _vmem_capacity_bytes():
    try:
        return int(pltpu.get_tpu_info().vmem_capacity_bytes)
    except Exception:
        return 64 << 20   # conservative fallback (v7x per-TensorCore VMEM)


def _choose_tiles(n_rows, feat, out_feat, x_isz, c_isz, o_isz, vmem_cap):
    """Pick (tile_n, tile_o, vmem_estimate_bytes)."""
    tile_o = out_feat if out_feat <= _MAX_TILE_O else _MAX_TILE_O
    tile_n = min(_round_up(max(n_rows, 1), 16), _MAX_TILE_N)

    def est(tn):
        # Pallas double-buffers every auto-pipelined block (including the
        # grid-invariant weight/bias blocks), so count them twice.
        # TODO(synk): pipeline_mode=pl.Buffered(1) on the weight/bias specs
        # would halve their footprint once single-buffering is needed.
        return (2 * tn * feat * x_isz            # x input blocks
                + 2 * feat * tile_o * c_isz      # weight blocks
                + 2 * 1 * tile_o * 4             # bias blocks (f32)
                + 2 * tn * tile_o * o_isz)       # output blocks

    budget = int(0.7 * min(vmem_cap, 128 << 20))
    while est(tile_n) > budget and tile_n > 128:
        tile_n = max(128, _round_up(tile_n // 2, 16))
    return tile_n, tile_o, est(tile_n)


def _atomwise_kernel(x_ref, w_ref, b_ref, o_ref, *, compute_dtype):
    # x_ref: (tile_n, F) input dtype; w_ref: (F, tile_o) compute dtype
    # b_ref: (1, tile_o) f32;          o_ref: (tile_n, tile_o) out dtype
    x = x_ref[...].astype(compute_dtype)   # in-kernel VPU cast, hidden by DMA
    acc = jnp.dot(x, w_ref[...], preferred_element_type=jnp.float32)
    o_ref[...] = (acc + b_ref[...]).astype(o_ref.dtype)


def prepare_atomwise_params(weight, bias, compute_dtype=jnp.bfloat16):
    """One-time prep: PyTorch nn.Linear W [O, F], b [O] ->
    (W^T as [F, O] compute dtype, bias as [1, O] f32).  Done once so the
    transpose/cast are not re-run as XLA copies on every forward call."""
    w_fo = jnp.asarray(weight).T.astype(compute_dtype)
    b2d = jnp.asarray(bias).astype(jnp.float32).reshape(1, -1)
    return w_fo, b2d


@functools.partial(jax.jit, static_argnames=("compute_dtype",))
def atomwise_forward(x, w_fo, b2d, *, compute_dtype=jnp.bfloat16):
    """x: [..., F]; w_fo: [F, O]; b2d: [1, O] -> [..., O]."""
    lead = x.shape[:-1]
    F = x.shape[-1]
    O = w_fo.shape[1]
    N = 1
    for d in lead:
        N *= d
    out_dtype = x.dtype

    x2d = x.reshape(N, F)   # metadata-only reshape; no cast, no pad

    x_isz = jnp.dtype(x.dtype).itemsize
    c_isz = jnp.dtype(w_fo.dtype).itemsize
    o_isz = jnp.dtype(out_dtype).itemsize
    vmem_cap = _vmem_capacity_bytes()
    tile_n, tile_o, est = _choose_tiles(N, F, O, x_isz, c_isz, o_isz, vmem_cap)

    grid = (pl.cdiv(N, tile_n), pl.cdiv(O, tile_o))

    # Raise the scoped VMEM limit whenever the estimate nears v5e's 16 MiB
    # default; cap at 85% of this generation's physical capacity (64 MiB per
    # TensorCore on v7x) to keep headroom for Mosaic internal scratch.
    vmem_limit = None
    if est > (12 << 20):
        vmem_limit = int(min(est + (8 << 20), int(0.85 * vmem_cap)))

    cost = pl.CostEstimate(
        flops=2 * N * F * O,
        transcendentals=0,
        bytes_accessed=(N * F * x_isz + F * O * c_isz + O * 4
                        + N * O * o_isz),
    )

    kernel = functools.partial(_atomwise_kernel, compute_dtype=compute_dtype)

    out2d = pl.pallas_call(
        kernel,
        out_shape=jax.ShapeDtypeStruct((N, O), out_dtype),
        grid=grid,
        in_specs=[
            pl.BlockSpec((tile_n, F), lambda i, j: (i, 0)),
            pl.BlockSpec((F, tile_o), lambda i, j: (0, j)),
            pl.BlockSpec((1, tile_o), lambda i, j: (0, j)),
        ],
        out_specs=pl.BlockSpec((tile_n, tile_o), lambda i, j: (i, j)),
        compiler_params=pltpu.CompilerParams(
            dimension_semantics=("parallel", "parallel"),
            vmem_limit_bytes=vmem_limit,
        ),
        cost_estimate=cost,
    )(x2d, w_fo, b2d)

    return out2d.reshape(*lead, O)


def init_atomwise_params(key, feature_number, output_feature_number=None):
    """Deterministic init matching nn.Linear shapes: W [O, F], b [O]."""
    if output_feature_number is None:
        output_feature_number = feature_number
    kw, kb = jax.random.split(key)
    bound = 1.0 / (feature_number ** 0.5)  # PyTorch default uniform bound
    weight = jax.random.uniform(
        kw, (output_feature_number, feature_number),
        minval=-bound, maxval=bound, dtype=jnp.float32)
    bias = jax.random.uniform(
        kb, (output_feature_number,),
        minval=-bound, maxval=bound, dtype=jnp.float32)
    return weight, bias


if __name__ == "__main__":
    key = jax.random.PRNGKey(0)
    kx, kp = jax.random.split(key)

    # Small shapes consistent with the module; odd atom count exercises the
    # ragged-row (masked store) path, O=16 exercises the unpadded-O path.
    batch, atoms, feature, out_feature = 2, 9, 32, 16
    x = jax.random.normal(kx, (batch, atoms, feature), dtype=jnp.float32)
    weight, bias = init_atomwise_params(kp, feature, out_feature)
    w_fo, b2d = prepare_atomwise_params(weight, bias)

    atom_number = atoms  # unused by forward, kept only for API parity

    y = atomwise_forward(x, w_fo, b2d)
    y = jax.block_until_ready(y)
    assert y.shape == (batch, atoms, out_feature)

    # Reference 1: same math as the kernel (bf16 operands, f32 accumulate).
    xb = x.astype(jnp.bfloat16).astype(jnp.float32)
    wb = weight.astype(jnp.bfloat16).astype(jnp.float32)
    y_bf16_ref = xb @ wb.T + bias
    assert jnp.allclose(y, y_bf16_ref, atol=1e-3, rtol=1e-3)

    # Reference 2: full-f32 nn.Linear semantics (loose tol for bf16 compute).
    y_f32_ref = x @ weight.T + bias
    assert jnp.allclose(y, y_f32_ref, atol=5e-2, rtol=5e-2)

    print("KERNEL_OK")
</pallas_src>

<mosaic_0001>
module attributes {stable_mosaic.version = 11 : i64} {
  func.func @_atomwise_kernel(%arg0: i32, %arg1: i32, %arg2: memref<32x32xf32, #tpu.memory_space<vmem>>, %arg3: memref<32x16xbf16, #tpu.memory_space<vmem>>, %arg4: memref<1x16xf32, #tpu.memory_space<vmem>>, %arg5: memref<32x16xf32, #tpu.memory_space<vmem>>) attributes {dimension_semantics = [#tpu.dimension_semantics<parallel>, #tpu.dimension_semantics<parallel>], iteration_bounds = array<i64: 1, 1>, scalar_prefetch = 0 : i64, scratch_operands = 0 : i64, tpu.core_type = #tpu.core_type<tc>, window_params = [{transform_indices = @transform_0, window_bounds = array<i64: 32, 32>}, {transform_indices = @transform_1, window_bounds = array<i64: 32, 16>}, {transform_indices = @transform_2, window_bounds = array<i64: 1, 16>}, {transform_indices = @transform_3, window_bounds = array<i64: 32, 16>}]} {
    %c0 = arith.constant 0 : index
    %c0_0 = arith.constant 0 : index
    %0 = vector.load %arg2[%c0, %c0_0] : memref<32x32xf32, #tpu.memory_space<vmem>>, vector<32x32xf32>
    %1 = arith.truncf %0 : vector<32x32xf32> to vector<32x32xbf16>
    %c0_1 = arith.constant 0 : index
    %c0_2 = arith.constant 0 : index
    %2 = vector.load %arg3[%c0_1, %c0_2] : memref<32x16xbf16, #tpu.memory_space<vmem>>, vector<32x16xbf16>
    %cst = arith.constant dense<0.000000e+00> : vector<32x16xf32>
    %3 = tpu.matmul %1, %2, %cst {dimension_numbers = #tpu.dot_dimension_numbers<[1], [0], [0], [1], [0, 0, 1, 1], [], []>} : vector<32x32xbf16>, vector<32x16xbf16>, vector<32x16xf32> -> vector<32x16xf32>
    %c0_3 = arith.constant 0 : index
    %c0_4 = arith.constant 0 : index
    %4 = vector.load %arg4[%c0_3, %c0_4] : memref<1x16xf32, #tpu.memory_space<vmem>>, vector<1x16xf32>
    %5 = vector.broadcast %4 : vector<1x16xf32> to vector<32x16xf32>
    %6 = arith.addf %3, %5 : vector<32x16xf32>
    %c0_5 = arith.constant 0 : index
    %c0_6 = arith.constant 0 : index
    %7 = vector.load %arg5[%c0_5, %c0_6] : memref<32x16xf32, #tpu.memory_space<vmem>>, vector<32x16xf32>
    tpu.vector_store %arg5[%c0_5, %c0_6], %6 {strides = array<i32>} : memref<32x16xf32, #tpu.memory_space<vmem>>, vector<32x16xf32>,
    return
  }
  func.func @transform_0(%arg0: i32, %arg1: i32) -> (i32, i32) {
    %c0_i32 = arith.constant 0 : i32
    %c0_i32_0 = arith.constant 0 : i32
    return %arg0, %c0_i32 : i32, i32
  }
  func.func @transform_1(%arg0: i32, %arg1: i32) -> (i32, i32) {
    %c0_i32 = arith.constant 0 : i32
    %c0_i32_0 = arith.constant 0 : i32
    return %c0_i32, %arg1 : i32, i32
  }
  func.func @transform_2(%arg0: i32, %arg1: i32) -> (i32, i32) {
    %c0_i32 = arith.constant 0 : i32
    %c0_i32_0 = arith.constant 0 : i32
    return %c0_i32, %arg1 : i32, i32
  }
  func.func @transform_3(%arg0: i32, %arg1: i32) -> (i32, i32) {
    %c0_i32 = arith.constant 0 : i32
    return %arg0, %arg1 : i32, i32
  }
}

</mosaic_0001>

<llo_original>
// kernel: atomwise_forward.1
$region0: #{atomwise_forward.1}
  #allocation0 [shape = 'u32[]', space=smem, size = 0x4, offset = 0x4, fixed_abs, tag = 'smem constant byte address 0x4 - core index']
  #allocation1 [shape = 'u32[72,128]{1,0:T(1,128)}', space=vmem, size = 0x9000, scoped, tag = 'internal scratch']
  %s0 = inlined_call_operand.vmem [shape: f32[18,32], index: 0, kind: input, shape index: {}]
  %s1 = inlined_call_operand.vmem [shape: bf16[32,16], index: 1, kind: input, shape index: {}]
  %s2 = inlined_call_operand.vmem [shape: f32[1,16], index: 2, kind: input, shape index: {}]
  %s3 = inlined_call_operand.vmem [shape: f32[18,16], index: 3, kind: output, shape index: {}]
  %s4 = sld [smem:[#allocation0]]
  $region56: #{atomwise_forward.1} parent=0
    _
  %s6 = ssub.s32 1, %s4
  %s7 = scalar_select 0, %s6, %s4
  $region1: #{atomwise_forward.1} parent=0
    #allocation2 [shape = 'u8[16384]{0}', space=vmem, size = 0x4000, scoped, tag = 'output window, operand 0, single buffered']
    // Predicated region
    $region2: #{atomwise_forward.1} parent=1 // pred_check
      _
    $region3: #{atomwise_forward.1} parent=1 // pred_check_branch
      %9 = sbr.rel (0) target = $region5
    $region4: #{atomwise_forward.1} parent=1 // pred_region
      _
    $region5: #{atomwise_forward.1} parent=1 // pred_fallthru
      _
    // Predicated region
    $region6: #{atomwise_forward.1} parent=1 // pred_check
      _
    $region7: #{atomwise_forward.1} parent=1 // pred_check_branch
      %11 = sbr.rel (0) target = $region9
    $region8: #{atomwise_forward.1} parent=1 // pred_region
      _
    $region9: #{atomwise_forward.1} parent=1 // pred_fallthru
      _
    // Predicated region
    $region10: #{atomwise_forward.1} parent=1 // pred_check
      _
    $region11: #{atomwise_forward.1} parent=1 // pred_check_branch
      %13 = sbr.rel (0) target = $region13
    $region12: #{atomwise_forward.1} parent=1 // pred_region
      _
    $region13: #{atomwise_forward.1} parent=1 // pred_fallthru
      _
    %v15 = vld [vmem:[%s0] sm:$0xff]
    %v16 = vld [vmem:[%s0 + $0x8] sm:$0xff]
    %v17 = vld [vmem:[%s0 + $0x10] sm:$0xff]
    %v18 = vld [vmem:[%s0 + $0x18] sm:$0xff]
    %v19 = vpack.c.bf16 %v16, %v15
    %v20 = vpack.c.bf16 %v18, %v17
    %v21 = vld [vmem:[%s1] sm:$0xf]
    %v22 = vld [vmem:[%s1 + $0x4] sm:$0xf]
    %v23 = vld [vmem:[%s1 + $0x8] sm:$0xf]
    %v24 = vld [vmem:[%s1 + $0xc] sm:$0xf]
    %v25 = vld [vmem:[%s2] sm:$0x1]
    %v27 = vperm.slane %v25, 0
    %v33 = vunpack.c.l.b16 %v21
    %v34 = vunpack.c.l.b16 %v22
    %v35 = vunpack.c.l.b16 %v23
    %v36 = vunpack.c.l.b16 %v24
    %v37 = vpack.c.b16 %v34, %v33
    %v38 = vpack.c.b16 %v36, %v35
    %vm41 = vcmask 261120
    %v43 = vsel %vm41, %v19, 0
    %v46 = vsel %vm41, %v20, 0
    %48 = vmatpush.bf16.msra.mxu0 0
    %49 = vmatpush.bf16.msra.mxu0 0
    %50 = vmatpush.bf16.msra.mxu0 0
    %51 = vmatpush.bf16.msra.mxu0 0
    %52 = vmatpush.bf16.msra.mxu0 0
    %53 = vmatpush.bf16.msra.mxu0 0
    %54 = vmatpush.bf16.msra.mxu0 %v38
    %55 = vmatpush.bf16.msra.mxu0 %v37
    %56 = vmatmul.bf16.gmra.mxu0 %v43
    %v57 = vpop.f32.mrf.mxu0
    %v58 = vadd.f32 %v27, %v57
    %v59 = vpop.f32.mrf.mxu0
    %v60 = vadd.f32 %v27, %v59
    %61 = vmatmul.bf16.gmra.mxu0 %v46
    %v62 = vpop.f32.mrf.mxu0
    %v63 = vadd.f32 %v27, %v62
    %v64 = vpop.f32.mrf.mxu0
    %v65 = vadd.f32 %v27, %v64
    %66 = vdwg.mxu0
    %vm67 = vcmask 130048
    %68 = vst.msk [vmem:[#allocation2] sm:$0xff] %vm67, %v58
    %69 = vst.msk [vmem:[#allocation2 + $0x8] sm:$0xff] %vm67, %v60
    %70 = vst.msk [vmem:[#allocation2 + $0x10] sm:$0xff] %vm67, %v63
    %71 = vst.msk [vmem:[#allocation2 + $0x18] sm:$0xff] %vm67, %v65
    // Predicated region
    $region14: #{atomwise_forward.1} parent=1 // pred_check
      _
    $region15: #{atomwise_forward.1} parent=1 // pred_check_branch
      %73 = sbr.rel (0) target = $region17
    $region16: #{atomwise_forward.1} parent=1 // pred_region
      // Predicated region
      $region18: #{atomwise_forward.1} parent=16 // pred_check
        _
      $region19: #{atomwise_forward.1} parent=16 // pred_check_branch
        %75 = sbr.rel (0) target = $region21
      $region20: #{atomwise_forward.1} parent=16 // pred_region
        // Predicated region
        $region22: #{atomwise_forward.1} parent=20 // pred_check
          _
        $region23: #{atomwise_forward.1} parent=20 // pred_check_branch
          %77 = sbr.rel (0) target = $region25
        $region24: #{atomwise_forward.1} parent=20 // pred_region
          // Predicated region
          $region37: #{atomwise_forward.1} parent=24 // pred_check
            _
          $region38: #{atomwise_forward.1} parent=24 // pred_check_branch
            %97 = sbr.rel (0) target = $region40
          $region39: #{atomwise_forward.1} parent=24 // pred_region
            loop: start=0, step=1, limit=1
            $region41: #{atomwise_forward.1} parent=39 // loop_pre_header
              _
            $region42: #{atomwise_forward.1} parent=39 // loop_header
              %s99 = sphi 0, %s103
              %p100 = scmp.ge.s32.totalorder %s99, 1
              %s104 = sphi [#allocation2], [#allocation2]
              %s105 = sphi %s3, %s3
            $region43: #{atomwise_forward.1} parent=39 // loop_header_branch
              %102 = sbr.rel (%p100) target = $region47
            $region44: #{atomwise_forward.1} parent=39 // loop_body
              %v106 = vld [vmem:[%s104] sm:$0xff]
              %107 = vst [vmem:[%s105] sm:$0xff] %v106
              %v108 = vld [vmem:[%s104 + $0x8] sm:$0xff]
              %109 = vst [vmem:[%s105 + $0x8] sm:$0xff] %v108
              %v110 = vld [vmem:[%s104 + $0x10] sm:$0xff]
              %111 = vst [vmem:[%s105 + $0x10] sm:$0xff] %v110
            $region45: #{atomwise_forward.1} parent=39 // loop_footer
              %s103 = sadd.s32 1, %s99
            $region46: #{atomwise_forward.1} parent=39 // loop_footer_branch
              %98 = sbr.rel target = $region42
            $region47: #{atomwise_forward.1} parent=39 // loop_exit
              _
          $region40: #{atomwise_forward.1} parent=24 // pred_fallthru
            _
          // Predicated region
          $region48: #{atomwise_forward.1} parent=24 // pred_check
            _
          $region49: #{atomwise_forward.1} parent=24 // pred_check_branch
            %113 = sbr.rel target = $region51
          $region50: #{atomwise_forward.1} parent=24 // pred_region
            _
          $region51: #{atomwise_forward.1} parent=24 // pred_fallthru
            _
        $region25: #{atomwise_forward.1} parent=20 // pred_fallthru
          _
        // Predicated region
        $region26: #{atomwise_forward.1} parent=20 // pred_check
          _
        $region27: #{atomwise_forward.1} parent=20 // pred_check_branch
          %79 = sbr.rel target = $region29
        $region28: #{atomwise_forward.1} parent=20 // pred_region
          %s81 = ssub.s32 256, 1
          loop: start=0, step=1, limit=1
          $region30: #{atomwise_forward.1} parent=28 // loop_pre_header
            _
          $region31: #{atomwise_forward.1} parent=28 // loop_header
            %s83 = sphi 0, %s87
            %p84 = scmp.ge.s32.totalorder %s83, 1
            %s88 = sphi [#allocation2], [#allocation2]
            %s89 = sphi %s3, %s3
          $region32: #{atomwise_forward.1} parent=28 // loop_header_branch
            %86 = sbr.rel (%p84) target = $region36
          $region33: #{atomwise_forward.1} parent=28 // loop_body
            %v90 = vld [vmem:[%s88] sm:%s81]
            %91 = vst [vmem:[%s89] sm:%s81] %v90
            %v92 = vld [vmem:[%s88 + $0x8] sm:%s81]
            %93 = vst [vmem:[%s89 + $0x8] sm:%s81] %v92
            %v94 = vld [vmem:[%s88 + $0x10] sm:%s81]
            %95 = vst [vmem:[%s89 + $0x10] sm:%s81] %v94
          $region34: #{atomwise_forward.1} parent=28 // loop_footer
            %s87 = sadd.s32 1, %s83
          $region35: #{atomwise_forward.1} parent=28 // loop_footer_branch
            %82 = sbr.rel target = $region31
          $region36: #{atomwise_forward.1} parent=28 // loop_exit
            _
        $region29: #{atomwise_forward.1} parent=20 // pred_fallthru
          _
      $region21: #{atomwise_forward.1} parent=16 // pred_fallthru
        _
      %114 = vnop
    $region17: #{atomwise_forward.1} parent=1 // pred_fallthru
      _
    // Predicated region
    $region52: #{atomwise_forward.1} parent=1 // pred_check
      _
    $region53: #{atomwise_forward.1} parent=1 // pred_check_branch
      %116 = sbr.rel (0) target = $region55
    $region54: #{atomwise_forward.1} parent=1 // pred_region
      _
    $region55: #{atomwise_forward.1} parent=1 // pred_fallthru
      _

</llo_original>
